<compile_context>
chip_gen: v7x
topology: tpu7x:2x2x1
jax: 0.10.0
libtpu: 0.0.40
codegen_flags: <defaults>
</compile_context>

<pallas_src>
import jax
import jax.numpy as jnp
from jax.experimental import pallas as pl
from jax.experimental.pallas import tpu as pltpu

LN_EPS = 1e-5      # torch.nn.LayerNorm default
HEAD_PAD = 128     # lane-dense output width for the fused policy+value head


# ---------------------------------------------------------------------------
# Fused kernel: (LayerNorm -> Linear -> ReLU) x N  ->  merged policy/value head
# ---------------------------------------------------------------------------
def make_fused_mlp_kernel(layer_shapes, head_in, n_edges):
    """layer_shapes: list of (in_size, out_size) per MLPLayer (static)."""
    num_layers = len(layer_shapes)

    def kernel(x_ref, w_ref, b_ref, out_ref):
        b_all = b_ref[...]                                   # (L+1, HEAD_PAD)
        h = x_ref[...].astype(jnp.float32)                   # (blk, F_in)

        for i, (in_size, out_size) in enumerate(layer_shapes):   # static unroll
            # --- LayerNorm (biased, two-pass variance; affine folded into w/b) ---
            mean = jnp.mean(h, axis=-1, keepdims=True)
            var = jnp.mean((h - mean) ** 2, axis=-1, keepdims=True)
            xn = (h - mean) * jax.lax.rsqrt(var + LN_EPS)
            # --- Linear -> ReLU (MXU matmul, f32 accumulate) ---
            w = w_ref[i][:in_size, :out_size]                 # static slices
            b = b_all[i:i + 1, :out_size]
            y = jnp.dot(xn, w, preferred_element_type=jnp.float32) + b
            h = jnp.maximum(y, 0.0)

        # --- Fused heads: cols [0, n_edges) = policy logits, col n_edges =
        #     value (tanh), remaining cols are exact-zero padding. ---
        w = w_ref[num_layers][:head_in, :]
        b = b_all[num_layers:num_layers + 1, :]
        y = jnp.dot(h, w, preferred_element_type=jnp.float32) + b
        col = jax.lax.broadcasted_iota(jnp.int32, y.shape, 1)
        out_ref[...] = jnp.where(col == n_edges, jnp.tanh(y), y)

    return kernel


# ---------------------------------------------------------------------------
# Parameters (PyTorch-shaped originals + packed/folded kernel-side slabs)
# ---------------------------------------------------------------------------
def init_mlp_params(num_rows, num_cols, hidden_sizes, key):
    n_edges = 2 * num_rows * num_cols + num_rows + num_cols
    input_size = n_edges + 2 * num_rows * num_cols
    assert n_edges + 1 <= HEAD_PAD

    layers = []
    in_size = input_size
    for h in hidden_sizes:
        key, k_w, k_b, k_g, k_be = jax.random.split(key, 5)
        scale = 1.0 / jnp.sqrt(jnp.float32(in_size))
        layers.append({
            # Non-trivial LN affine so the affine-folding path is exercised.
            "gamma": jax.random.uniform(k_g, (1, in_size), jnp.float32, 0.8, 1.2),
            "beta": jax.random.uniform(k_be, (1, in_size), jnp.float32, -0.1, 0.1),
            # stored as (in, out) == torch weight (out, in) transposed
            "w": jax.random.uniform(k_w, (in_size, h), jnp.float32, -scale, scale),
            "b": jax.random.uniform(k_b, (1, h), jnp.float32, -scale, scale),
        })
        in_size = h

    out_size = hidden_sizes[-1]
    scale = 1.0 / jnp.sqrt(jnp.float32(out_size))
    key, k_pw, k_pb, k_vw, k_vb = jax.random.split(key, 5)
    policy_w = jax.random.uniform(k_pw, (out_size, n_edges), jnp.float32, -scale, scale)
    policy_b = jax.random.uniform(k_pb, (1, n_edges), jnp.float32, -scale, scale)
    value_w = jax.random.uniform(k_vw, (out_size, 1), jnp.float32, -scale, scale)
    value_b = jax.random.uniform(k_vb, (1, 1), jnp.float32, -scale, scale)

    params = {
        "layers": layers, "n_edges": n_edges, "input_size": input_size,
        "policy_w": policy_w, "policy_b": policy_b,
        "value_w": value_w, "value_b": value_b,
    }

    # ---- Packed kernel-side parameters (2 operands total) ----
    layer_shapes = [(l["w"].shape[0], l["w"].shape[1]) for l in layers]
    head_in = out_size
    num_mats = len(layers) + 1
    in_pad = max([s[0] for s in layer_shapes] + [head_in])
    in_pad = ((in_pad + 7) // 8) * 8                    # sublane-align slab rows

    w_slab = jnp.zeros((num_mats, in_pad, HEAD_PAD), jnp.float32)
    b_slab = jnp.zeros((num_mats, HEAD_PAD), jnp.float32)
    for i, l in enumerate(layers):
        # Fold LN affine into the Linear: w' = diag(gamma) @ w, b' = beta @ w + b.
        w_f = l["w"] * l["gamma"].reshape(-1, 1)
        b_f = l["beta"] @ l["w"] + l["b"]
        d_in, d_out = l["w"].shape
        w_slab = w_slab.at[i, :d_in, :d_out].set(w_f)
        b_slab = b_slab.at[i, :d_out].set(b_f[0])
    # Merged policy+value head, zero-padded to HEAD_PAD lanes.
    w_slab = w_slab.at[num_mats - 1, :head_in, :n_edges].set(policy_w)
    w_slab = w_slab.at[num_mats - 1, :head_in, n_edges:n_edges + 1].set(value_w)
    b_slab = b_slab.at[num_mats - 1, :n_edges].set(policy_b[0])
    b_slab = b_slab.at[num_mats - 1, n_edges].set(value_b[0, 0])

    params["w_slab"] = w_slab
    params["b_slab"] = b_slab
    params["layer_shapes"] = layer_shapes
    params["head_in"] = head_in
    return params


# ---------------------------------------------------------------------------
# Forward (single fused pallas_call with a batch grid)
# ---------------------------------------------------------------------------
def mlp_forward(params, x, block_b=512):
    n_edges = params["n_edges"]
    layer_shapes = params["layer_shapes"]
    head_in = params["head_in"]
    w_slab, b_slab = params["w_slab"], params["b_slab"]
    num_mats, in_pad, _ = w_slab.shape

    B, f_in = x.shape
    # Batch tile: multiple of 8 sublanes, capped by the (padded) batch size.
    blk = min(block_b, ((B + 7) // 8) * 8)
    blk = max(8, ((blk + 7) // 8) * 8)
    B_pad = ((B + blk - 1) // blk) * blk

    x = x.astype(jnp.float32)
    if B_pad != B:
        x = jnp.pad(x, ((0, B_pad - B), (0, 0)))

    out = pl.pallas_call(
        make_fused_mlp_kernel(layer_shapes, head_in, n_edges),
        out_shape=jax.ShapeDtypeStruct((B_pad, HEAD_PAD), jnp.float32),
        grid=(pl.cdiv(B_pad, blk),),
        in_specs=[
            # x: per-step (blk, F_in) tile, auto double-buffered.
            pl.BlockSpec((blk, f_in), lambda i: (i, 0)),
            # Weights / biases: constant index_map -> DMA'd once, VMEM-resident.
            pl.BlockSpec((num_mats, in_pad, HEAD_PAD), lambda i: (0, 0, 0)),
            pl.BlockSpec((num_mats, HEAD_PAD), lambda i: (0, 0)),
        ],
        out_specs=pl.BlockSpec((blk, HEAD_PAD), lambda i: (i, 0)),
        compiler_params=pltpu.CompilerParams(
            dimension_semantics=("parallel",)),
    )(x, w_slab, b_slab)

    policy_logits = out[:B, :n_edges]
    value = out[:B, n_edges]
    return {"policy": policy_logits, "value": value}


# ---------------------------------------------------------------------------
# Pure-JAX reference (mirrors the PyTorch module exactly, unfolded params)
# ---------------------------------------------------------------------------
def mlp_forward_ref(params, x):
    h = x.astype(jnp.float32)
    for layer in params["layers"]:
        mean = jnp.mean(h, axis=-1, keepdims=True)
        var = jnp.mean((h - mean) ** 2, axis=-1, keepdims=True)
        xn = (h - mean) / jnp.sqrt(var + LN_EPS)
        xn = xn * layer["gamma"] + layer["beta"]
        h = jnp.maximum(xn @ layer["w"] + layer["b"], 0.0)
    policy = h @ params["policy_w"] + params["policy_b"]
    value = jnp.tanh(h @ params["value_w"] + params["value_b"])
    return policy, jnp.squeeze(value, axis=-1)


# ---------------------------------------------------------------------------
if __name__ == "__main__":
    num_rows, num_cols = 2, 2
    hidden_sizes = [32, 32]
    batch = 8                                   # one full sublane tile

    n_edges = 2 * num_rows * num_cols + num_rows + num_cols          # 12
    input_size = n_edges + 2 * num_rows * num_cols                   # 20

    key = jax.random.PRNGKey(0)
    key, k_params, k_x = jax.random.split(key, 3)
    params = init_mlp_params(num_rows, num_cols, hidden_sizes, k_params)

    # Board-state-like input (0/1 edge occupancy + owner planes).
    x = jax.random.bernoulli(k_x, 0.5, (batch, input_size)).astype(jnp.float32)

    out = mlp_forward(params, x)
    jax.block_until_ready(out)

    assert out["policy"].shape == (batch, n_edges)
    assert out["value"].shape == (batch,)
    assert out["policy"].dtype == jnp.float32
    assert bool(jnp.all(jnp.abs(out["value"]) <= 1.0))

    # Correctness vs pure-JAX reference of the PyTorch semantics.
    ref_policy, ref_value = mlp_forward_ref(params, x)
    assert bool(jnp.allclose(out["policy"], ref_policy, atol=1e-4, rtol=1e-4))
    assert bool(jnp.allclose(out["value"], ref_value, atol=1e-4, rtol=1e-4))

    print("KERNEL_OK")
</pallas_src>

<mosaic_0001>
module attributes {stable_mosaic.version = 11 : i64} {
  func.func @kernel(%arg0: i32, %arg1: memref<8x20xf32, #tpu.memory_space<vmem>>, %arg2: memref<3x32x128xf32, #tpu.memory_space<vmem>>, %arg3: memref<3x128xf32, #tpu.memory_space<vmem>>, %arg4: memref<8x128xf32, #tpu.memory_space<vmem>>) attributes {dimension_semantics = [#tpu.dimension_semantics<parallel>], iteration_bounds = array<i64: 1>, scalar_prefetch = 0 : i64, scratch_operands = 0 : i64, tpu.core_type = #tpu.core_type<tc>, window_params = [{transform_indices = @transform_0, window_bounds = array<i64: 8, 20>}, {pipeline_mode = #tpu.pipeline_mode<synchronous>, transform_indices = @transform_1, window_bounds = array<i64: 3, 32, 128>}, {pipeline_mode = #tpu.pipeline_mode<synchronous>, transform_indices = @transform_2, window_bounds = array<i64: 3, 128>}, {transform_indices = @transform_3, window_bounds = array<i64: 8, 128>}]} {
    %c0 = arith.constant 0 : index
    %c0_0 = arith.constant 0 : index
    %0 = vector.load %arg3[%c0, %c0_0] : memref<3x128xf32, #tpu.memory_space<vmem>>, vector<3x128xf32>
    %c0_1 = arith.constant 0 : index
    %c0_2 = arith.constant 0 : index
    %1 = vector.load %arg1[%c0_1, %c0_2] : memref<8x20xf32, #tpu.memory_space<vmem>>, vector<8x20xf32>
    %cst = arith.constant dense<0.000000e+00> : vector<8xf32>
    %2 = vector.multi_reduction <add>, %1, %cst [1] : vector<8x20xf32> to vector<8xf32>
    %3 = vector.shape_cast %2 : vector<8xf32> to vector<8x1xf32>
    %cst_3 = arith.constant 2.000000e+01 : f32
    %4 = vector.broadcast %cst_3 : f32 to vector<8x1xf32>
    %5 = arith.divf %3, %4 : vector<8x1xf32>
    %6 = vector.broadcast %5 : vector<8x1xf32> to vector<8x20xf32>
    %7 = arith.subf %1, %6 : vector<8x20xf32>
    %8 = arith.mulf %7, %7 : vector<8x20xf32>
    %cst_4 = arith.constant dense<0.000000e+00> : vector<8xf32>
    %9 = vector.multi_reduction <add>, %8, %cst_4 [1] : vector<8x20xf32> to vector<8xf32>
    %10 = vector.shape_cast %9 : vector<8xf32> to vector<8x1xf32>
    %cst_5 = arith.constant 2.000000e+01 : f32
    %11 = vector.broadcast %cst_5 : f32 to vector<8x1xf32>
    %12 = arith.divf %10, %11 : vector<8x1xf32>
    %13 = vector.broadcast %5 : vector<8x1xf32> to vector<8x20xf32>
    %14 = arith.subf %1, %13 : vector<8x20xf32>
    %cst_6 = arith.constant 9.99999974E-6 : f32
    %15 = vector.broadcast %cst_6 : f32 to vector<8x1xf32>
    %16 = arith.addf %12, %15 : vector<8x1xf32>
    %17 = math.rsqrt %16 : vector<8x1xf32>
    %18 = vector.broadcast %17 : vector<8x1xf32> to vector<8x20xf32>
    %19 = arith.mulf %14, %18 : vector<8x20xf32>
    %c0_7 = arith.constant 0 : index
    %c0_8 = arith.constant 0 : index
    %c0_9 = arith.constant 0 : index
    %20 = vector.load %arg2[%c0_7, %c0_8, %c0_9] : memref<3x32x128xf32, #tpu.memory_space<vmem>>, vector<1x32x128xf32>
    %21 = vector.shape_cast %20 : vector<1x32x128xf32> to vector<32x128xf32>
    %22 = vector.extract_strided_slice %21 {offsets = [0, 0], sizes = [20, 32], strides = [1, 1]} : vector<32x128xf32> to vector<20x32xf32>
    %23 = vector.extract_strided_slice %0 {offsets = [0, 0], sizes = [1, 32], strides = [1, 1]} : vector<3x128xf32> to vector<1x32xf32>
    %cst_10 = arith.constant dense<0.000000e+00> : vector<8x32xf32>
    %24 = tpu.matmul %19, %22, %cst_10 {dimension_numbers = #tpu.dot_dimension_numbers<[1], [0], [0], [1], [0, 0, 1, 1], [], []>} : vector<8x20xf32>, vector<20x32xf32>, vector<8x32xf32> -> vector<8x32xf32>
    %25 = vector.broadcast %23 : vector<1x32xf32> to vector<8x32xf32>
    %26 = arith.addf %24, %25 : vector<8x32xf32>
    %cst_11 = arith.constant 0.000000e+00 : f32
    %27 = vector.broadcast %cst_11 : f32 to vector<8x32xf32>
    %28 = arith.maximumf %26, %27 : vector<8x32xf32>
    %cst_12 = arith.constant dense<0.000000e+00> : vector<8xf32>
    %29 = vector.multi_reduction <add>, %28, %cst_12 [1] : vector<8x32xf32> to vector<8xf32>
    %30 = vector.shape_cast %29 : vector<8xf32> to vector<8x1xf32>
    %cst_13 = arith.constant 3.200000e+01 : f32
    %31 = vector.broadcast %cst_13 : f32 to vector<8x1xf32>
    %32 = arith.divf %30, %31 : vector<8x1xf32>
    %33 = vector.broadcast %32 : vector<8x1xf32> to vector<8x32xf32>
    %34 = arith.subf %28, %33 : vector<8x32xf32>
    %35 = arith.mulf %34, %34 : vector<8x32xf32>
    %cst_14 = arith.constant dense<0.000000e+00> : vector<8xf32>
    %36 = vector.multi_reduction <add>, %35, %cst_14 [1] : vector<8x32xf32> to vector<8xf32>
    %37 = vector.shape_cast %36 : vector<8xf32> to vector<8x1xf32>
    %cst_15 = arith.constant 3.200000e+01 : f32
    %38 = vector.broadcast %cst_15 : f32 to vector<8x1xf32>
    %39 = arith.divf %37, %38 : vector<8x1xf32>
    %40 = vector.broadcast %32 : vector<8x1xf32> to vector<8x32xf32>
    %41 = arith.subf %28, %40 : vector<8x32xf32>
    %cst_16 = arith.constant 9.99999974E-6 : f32
    %42 = vector.broadcast %cst_16 : f32 to vector<8x1xf32>
    %43 = arith.addf %39, %42 : vector<8x1xf32>
    %44 = math.rsqrt %43 : vector<8x1xf32>
    %45 = vector.broadcast %44 : vector<8x1xf32> to vector<8x32xf32>
    %46 = arith.mulf %41, %45 : vector<8x32xf32>
    %c1 = arith.constant 1 : index
    %c0_17 = arith.constant 0 : index
    %c0_18 = arith.constant 0 : index
    %47 = vector.load %arg2[%c1, %c0_17, %c0_18] : memref<3x32x128xf32, #tpu.memory_space<vmem>>, vector<1x32x128xf32>
    %48 = vector.shape_cast %47 : vector<1x32x128xf32> to vector<32x128xf32>
    %49 = vector.extract_strided_slice %48 {offsets = [0, 0], sizes = [32, 32], strides = [1, 1]} : vector<32x128xf32> to vector<32x32xf32>
    %50 = vector.extract_strided_slice %0 {offsets = [1, 0], sizes = [1, 32], strides = [1, 1]} : vector<3x128xf32> to vector<1x32xf32>
    %cst_19 = arith.constant dense<0.000000e+00> : vector<8x32xf32>
    %51 = tpu.matmul %46, %49, %cst_19 {dimension_numbers = #tpu.dot_dimension_numbers<[1], [0], [0], [1], [0, 0, 1, 1], [], []>} : vector<8x32xf32>, vector<32x32xf32>, vector<8x32xf32> -> vector<8x32xf32>
    %52 = vector.broadcast %50 : vector<1x32xf32> to vector<8x32xf32>
    %53 = arith.addf %51, %52 : vector<8x32xf32>
    %cst_20 = arith.constant 0.000000e+00 : f32
    %54 = vector.broadcast %cst_20 : f32 to vector<8x32xf32>
    %55 = arith.maximumf %53, %54 : vector<8x32xf32>
    %c2 = arith.constant 2 : index
    %c0_21 = arith.constant 0 : index
    %c0_22 = arith.constant 0 : index
    %56 = vector.load %arg2[%c2, %c0_21, %c0_22] : memref<3x32x128xf32, #tpu.memory_space<vmem>>, vector<1x32x128xf32>
    %57 = vector.shape_cast %56 : vector<1x32x128xf32> to vector<32x128xf32>
    %58 = vector.extract_strided_slice %0 {offsets = [2, 0], sizes = [1, 128], strides = [1, 1]} : vector<3x128xf32> to vector<1x128xf32>
    %cst_23 = arith.constant dense<0.000000e+00> : vector<8x128xf32>
    %59 = tpu.matmul %55, %57, %cst_23 {dimension_numbers = #tpu.dot_dimension_numbers<[1], [0], [0], [1], [0, 0, 1, 1], [], []>} : vector<8x32xf32>, vector<32x128xf32>, vector<8x128xf32> -> vector<8x128xf32>
    %60 = vector.broadcast %58 : vector<1x128xf32> to vector<8x128xf32>
    %61 = arith.addf %59, %60 : vector<8x128xf32>
    %62 = tpu.iota {dimensions = array<i32: 1>} : vector<8x128xi32>
    %c12_i32 = arith.constant 12 : i32
    %63 = vector.broadcast %c12_i32 : i32 to vector<8x128xi32>
    %64 = arith.cmpi eq, %62, %63 : vector<8x128xi32>
    %65 = math.tanh %61 : vector<8x128xf32>
    %66 = arith.select %64, %65, %61 : vector<8x128xi1>, vector<8x128xf32>
    %c0_24 = arith.constant 0 : index
    %c0_25 = arith.constant 0 : index
    %67 = vector.load %arg4[%c0_24, %c0_25] : memref<8x128xf32, #tpu.memory_space<vmem>>, vector<8x128xf32>
    tpu.vector_store %arg4[%c0_24, %c0_25], %66 {strides = array<i32>} : memref<8x128xf32, #tpu.memory_space<vmem>>, vector<8x128xf32>,
    return
  }
  func.func @transform_0(%arg0: i32) -> (i32, i32) {
    %c0_i32 = arith.constant 0 : i32
    %c0_i32_0 = arith.constant 0 : i32
    return %arg0, %c0_i32 : i32, i32
  }
  func.func @transform_1(%arg0: i32) -> (i32, i32, i32) {
    %c0_i32 = arith.constant 0 : i32
    %c0_i32_0 = arith.constant 0 : i32
    %c0_i32_1 = arith.constant 0 : i32
    %c0_i32_2 = arith.constant 0 : i32
    return %c0_i32, %c0_i32_0, %c0_i32_1 : i32, i32, i32
  }
  func.func @transform_2(%arg0: i32) -> (i32, i32) {
    %c0_i32 = arith.constant 0 : i32
    %c0_i32_0 = arith.constant 0 : i32
    %c0_i32_1 = arith.constant 0 : i32
    return %c0_i32, %c0_i32_0 : i32, i32
  }
  func.func @transform_3(%arg0: i32) -> (i32, i32) {
    %c0_i32 = arith.constant 0 : i32
    %c0_i32_0 = arith.constant 0 : i32
    return %arg0, %c0_i32 : i32, i32
  }
}

</mosaic_0001>

<llo_original>
// kernel: tpu_custom_call.1
$region0: #{tpu_custom_call.1}
  #allocation0 [shape = 'u32[]', space=smem, size = 0x4, offset = 0x4, fixed_abs, tag = 'smem constant byte address 0x4 - core index']
  #allocation1 [shape = 'u32[144,128]{1,0:T(1,128)}', space=vmem, size = 0x12000, scoped, tag = 'internal scratch']
  %s0 = inlined_call_operand.hbm [shape: f32[8,20], index: 0, kind: input, shape index: {}]
  %s1 = inlined_call_operand.hbm [shape: f32[3,32,128], index: 1, kind: input, shape index: {}]
  %s2 = inlined_call_operand.vmem [shape: f32[3,128], index: 2, kind: input, shape index: {}]
  %s3 = inlined_call_operand.hbm [shape: f32[8,128], index: 3, kind: output, shape index: {}]
  %s4 = sld [smem:[#allocation0]]
  $region30: #{tpu_custom_call.1} parent=0
    _
  %s6 = ssub.s32 1, %s4
  %s7 = scalar_select 0, %s6, %s4
  $region1: #{tpu_custom_call.1} parent=0
    #allocation2 [shape = 'u8[4096]{0}', space=vmem, size = 0x1000, scoped, tag = 'input window, operand 0, single buffered']
    #allocation3 [shape = 's32[1]{0}', space=sflag, size = 0x4, scoped, tag = 'scoped memory for tpu_custom_call.1']
    #allocation4 [shape = 's32[1]{0}', space=sflag, size = 0x4, scoped, tag = 'scoped memory for tpu_custom_call.1']
    #allocation5 [shape = 'u8[49152]{0}', space=vmem, size = 0xc000, scoped, tag = 'input window, operand 1, single buffered']
    #allocation6 [shape = 's32[1]{0}', space=sflag, size = 0x4, scoped, tag = 'scoped memory for tpu_custom_call.1']
    #allocation7 [shape = 'u8[4096]{0}', space=vmem, size = 0x1000, scoped, tag = 'output window, operand 0, single buffered']
    %8 = vsyncpa [#allocation3], 0
    %9 = vsyncpa [#allocation6], 0
    %10 = vsyncpa [#allocation4], 0
    // Predicated region
    $region2: #{tpu_custom_call.1} parent=1 // pred_check
      _
    $region3: #{tpu_custom_call.1} parent=1 // pred_check_branch
      %12 = sbr.rel (0) target = $region5
    $region4: #{tpu_custom_call.1} parent=1 // pred_region
      %s14 = ssub.s32 128, 128
      %15 = vsyncadd [#allocation3], %s14
      %s17 = sshll.u32 [#allocation2], 4
      %s18 = int_to_ptr.vmem [resolvable:$true] %s17
      %20 = dma.hbm_to_vmem [thread:$0]  %s0, 128, %s18, [#allocation3]
    $region5: #{tpu_custom_call.1} parent=1 // pred_fallthru
      _
    // Predicated region
    $region6: #{tpu_custom_call.1} parent=1 // pred_check
      _
    $region7: #{tpu_custom_call.1} parent=1 // pred_check_branch
      %22 = sbr.rel (0) target = $region9
    $region8: #{tpu_custom_call.1} parent=1 // pred_region
      %s24 = ssub.s32 1536, 1536
      %25 = vsyncadd [#allocation6], %s24
      %s26 = sshll.u32 [#allocation5], 4
      %s27 = int_to_ptr.vmem [resolvable:$true] %s26
      %32 = dma.hbm_to_vmem [thread:$0]  %s1, 1536, %s27, [#allocation6], 128, 128, 8
    $region9: #{tpu_custom_call.1} parent=1 // pred_fallthru
      _
    // Predicated region
    $region10: #{tpu_custom_call.1} parent=1 // pred_check
      _
    $region11: #{tpu_custom_call.1} parent=1 // pred_check_branch
      %34 = sbr.rel (0) target = $region13
    $region12: #{tpu_custom_call.1} parent=1 // pred_region
      _
    $region13: #{tpu_custom_call.1} parent=1 // pred_fallthru
      _
    // Predicated region
    $region14: #{tpu_custom_call.1} parent=1 // pred_check
      _
    $region15: #{tpu_custom_call.1} parent=1 // pred_check_branch
      %36 = sbr.rel (0) target = $region17
    $region16: #{tpu_custom_call.1} parent=1 // pred_region
      %37 = dma.done [#allocation3], 128
    $region17: #{tpu_custom_call.1} parent=1 // pred_fallthru
      _
    // Predicated region
    $region18: #{tpu_custom_call.1} parent=1 // pred_check
      _
    $region19: #{tpu_custom_call.1} parent=1 // pred_check_branch
      %39 = sbr.rel (0) target = $region21
    $region20: #{tpu_custom_call.1} parent=1 // pred_region
      %40 = dma.done [#allocation6], 1536
    $region21: #{tpu_custom_call.1} parent=1 // pred_fallthru
      _
    %v41 = vld [vmem:[%s2] sm:$0x7]
    %v42 = vld [vmem:[#allocation2] sm:$0xff]
    %vm43 = vcmask 162816
    %v44 = vsel %vm43, %v42, 0.0
    %45 = vadd.xlane.f32.xlu0 %v44
    %v46 = vpop.xlane.xlu0 %45
    %v47 = vrcp.pop 20.0
    %v48 = vmul.f32 %v46, %v47
    %v49 = vsub.f32 %v42, %v48
    %v50 = vmul.f32 %v49, %v49
    %v51 = vsel %vm43, %v50, 0.0
    %52 = vadd.xlane.f32.xlu0 %v51
    %v53 = vpop.xlane.xlu0 %52
    %v54 = vmul.f32 %v53, %v47
    %v55 = vadd.f32 %v54, 1e-05
    %v56 = vrsqrt.pop %v55
    %v57 = vmul.f32 %v49, %v56
    %v58 = vld [vmem:[#allocation5] sm:$0xff]
    %v59 = vld [vmem:[#allocation5 + $0x8] sm:$0xff]
    %v60 = vld [vmem:[#allocation5 + $0x10] sm:$0xff]
    %v61 = vlaneseq
    %v62 = vshrl.u32 %v61, 7
    %v63 = vsub.s32 0, %v62
    %v64 = vrot.slane %v41, %v63
    %v66 = vsel %vm43, %v57, 0
    %vm68 = vcmask 1043456
    %v70 = vsel %vm68, %v60, 0
    %72 = vmatprep.subr.mxu0 0.0
    %73 = vmatpush1.msra.mxu0 %v58
    %74 = vmatprep.subr.mxu0 0.0
    %75 = vmatpush1.msra.mxu0 %v59
    %76 = vmatprep.subr.mxu0 0.0
    %77 = vmatpush1.msra.mxu0 %v70
    %78 = vmatprep.subr.mxu0 0.0
    %79 = vmatpush1.msra.mxu0 0.0
    %80 = vmatprep.subr.mxu0 0.0
    %81 = vmatpush1.msra.mxu0 0.0
    %82 = vmatprep.subr.mxu0 0.0
    %83 = vmatpush1.msra.mxu0 0.0
    %84 = vmatprep.subr.mxu0 0.0
    %85 = vmatpush1.msra.mxu0 0.0
    %86 = vmatprep.subr.mxu0 0.0
    %87 = vmatpush1.msra.mxu0 0.0
    %88 = vmatprep.subr.mxu0 0.0
    %89 = vmatpush1.msra.mxu0 0.0
    %90 = vmatprep.subr.mxu0 0.0
    %91 = vmatpush1.msra.mxu0 0.0
    %92 = vmatprep.subr.mxu0 0.0
    %93 = vmatpush1.msra.mxu0 0.0
    %94 = vmatprep.subr.mxu0 0.0
    %95 = vmatpush1.msra.mxu0 0.0
    %96 = vmatprep.subr.mxu0 0.0
    %97 = vmatpush1.msra.mxu0 0.0
    %98 = vmatprep.subr.mxu0 0.0
    %99 = vmatpush1.msra.mxu0 0.0
    %100 = vmatprep.subr.mxu0 0.0
    %101 = vmatpush1.msra.mxu0 0.0
    %102 = vmatprep.subr.mxu0 0.0
    %103 = vmatpush1.msra.mxu0 0.0
    %104 = vmatprep.subr.mxu0 0.0
    %105 = vmatpush1.msra.mxu0 0.0
    %106 = vmatprep.subr.mxu0 0.0
    %107 = vmatpush1.msra.mxu0 0.0
    %108 = vmatprep.subr.mxu0 0.0
    %109 = vmatpush1.msra.mxu0 0.0
    %110 = vmatprep.subr.mxu0 0.0
    %111 = vmatpush1.msra.mxu0 0.0
    %112 = vmatprep.subr.mxu0 0.0
    %113 = vmatpush1.msra.mxu0 0.0
    %114 = vmatprep.subr.mxu0 0.0
    %115 = vmatpush1.msra.mxu0 0.0
    %116 = vmatprep.subr.mxu0 0.0
    %117 = vmatpush1.msra.mxu0 0.0
    %118 = vmatprep.subr.mxu0 0.0
    %119 = vmatpush1.msra.mxu0 0.0
    %120 = vmatprep.subr.mxu0 0.0
    %121 = vmatpush1.msra.mxu0 0.0
    %122 = vmatprep.subr.mxu0 0.0
    %123 = vmatpush1.msra.mxu0 0.0
    %124 = vmatprep.subr.mxu0 0.0
    %125 = vmatpush1.msra.mxu0 0.0
    %126 = vmatprep.subr.mxu0 0.0
    %127 = vmatpush1.msra.mxu0 0.0
    %128 = vmatprep.subr.mxu0 0.0
    %129 = vmatpush1.msra.mxu0 0.0
    %130 = vmatprep.subr.mxu0 0.0
    %131 = vmatpush1.msra.mxu0 0.0
    %132 = vmatprep.subr.mxu0 0.0
    %133 = vmatpush1.msra.mxu0 0.0
    %134 = vmatprep.subr.mxu0 0.0
    %135 = vmatpush1.msra.mxu0 0.0
    %136 = vmatprep.mubr.f32.mxu0 0.0
    %137 = vmatmul.mubr.f32.gmra.mrb[0].mxu0 %v66
    %v138 = vpop.f32.mrb[0].mxu0
    %v139 = vadd.f32 %v64, %v138
    %v140 = vpop.f32.mrb[0].mxu0
    %141 = vdwg.mxu0
    %v142 = vmax.f32 %v139, 0.0
    %vm143 = vcmask 261120
    %v144 = vsel %vm143, %v142, 0.0
    %145 = vadd.xlane.f32.xlu0 %v144
    %v146 = vpop.xlane.xlu0 %145
    %v147 = vrcp.pop 32.0
    %v148 = vmul.f32 %v146, %v147
    %v149 = vsub.f32 %v142, %v148
    %v150 = vmul.f32 %v149, %v149
    %v151 = vsel %vm143, %v150, 0.0
    %152 = vadd.xlane.f32.xlu0 %v151
    %v153 = vpop.xlane.xlu0 %152
    %v154 = vmul.f32 %v153, %v147
    %v155 = vadd.f32 %v154, 1e-05
    %v156 = vrsqrt.pop %v155
    %v157 = vmul.f32 %v149, %v156
    %s158 = scalar_lea.vmem [#allocation5], 32
    %v159 = vld [vmem:[%s158] sm:$0xff]
    %v160 = vld [vmem:[%s158 + $0x8] sm:$0xff]
    %v161 = vld [vmem:[%s158 + $0x10] sm:$0xff]
    %v162 = vld [vmem:[%s158 + $0x18] sm:$0xff]
    %v163 = vlaneseq
    %v164 = vshrl.u32 %v163, 7
    %v165 = vsub.s32 1, %v164
    %v166 = vrot.slane %v41, %v165
    %v168 = vsel %vm143, %v157, 0
    %170 = vmatprep.subr.mxu0 0.0
    %171 = vmatpush1.msra.mxu0 %v159
    %172 = vmatprep.subr.mxu0 0.0
    %173 = vmatpush1.msra.mxu0 %v160
    %174 = vmatprep.subr.mxu0 0.0
    %175 = vmatpush1.msra.mxu0 %v161
    %176 = vmatprep.subr.mxu0 0.0
    %177 = vmatpush1.msra.mxu0 %v162
    %178 = vmatprep.subr.mxu0 0.0
    %179 = vmatpush1.msra.mxu0 0.0
    %180 = vmatprep.subr.mxu0 0.0
    %181 = vmatpush1.msra.mxu0 0.0
    %182 = vmatprep.subr.mxu0 0.0
    %183 = vmatpush1.msra.mxu0 0.0
    %184 = vmatprep.subr.mxu0 0.0
    %185 = vmatpush1.msra.mxu0 0.0
    %186 = vmatprep.subr.mxu0 0.0
    %187 = vmatpush1.msra.mxu0 0.0
    %188 = vmatprep.subr.mxu0 0.0
    %189 = vmatpush1.msra.mxu0 0.0
    %190 = vmatprep.subr.mxu0 0.0
    %191 = vmatpush1.msra.mxu0 0.0
    %192 = vmatprep.subr.mxu0 0.0
    %193 = vmatpush1.msra.mxu0 0.0
    %194 = vmatprep.subr.mxu0 0.0
    %195 = vmatpush1.msra.mxu0 0.0
    %196 = vmatprep.subr.mxu0 0.0
    %197 = vmatpush1.msra.mxu0 0.0
    %198 = vmatprep.subr.mxu0 0.0
    %199 = vmatpush1.msra.mxu0 0.0
    %200 = vmatprep.subr.mxu0 0.0
    %201 = vmatpush1.msra.mxu0 0.0
    %202 = vmatprep.subr.mxu0 0.0
    %203 = vmatpush1.msra.mxu0 0.0
    %204 = vmatprep.subr.mxu0 0.0
    %205 = vmatpush1.msra.mxu0 0.0
    %206 = vmatprep.subr.mxu0 0.0
    %207 = vmatpush1.msra.mxu0 0.0
    %208 = vmatprep.subr.mxu0 0.0
    %209 = vmatpush1.msra.mxu0 0.0
    %210 = vmatprep.subr.mxu0 0.0
    %211 = vmatpush1.msra.mxu0 0.0
    %212 = vmatprep.subr.mxu0 0.0
    %213 = vmatpush1.msra.mxu0 0.0
    %214 = vmatprep.subr.mxu0 0.0
    %215 = vmatpush1.msra.mxu0 0.0
    %216 = vmatprep.subr.mxu0 0.0
    %217 = vmatpush1.msra.mxu0 0.0
    %218 = vmatprep.subr.mxu0 0.0
    %219 = vmatpush1.msra.mxu0 0.0
    %220 = vmatprep.subr.mxu0 0.0
    %221 = vmatpush1.msra.mxu0 0.0
    %222 = vmatprep.subr.mxu0 0.0
    %223 = vmatpush1.msra.mxu0 0.0
    %224 = vmatprep.subr.mxu0 0.0
    %225 = vmatpush1.msra.mxu0 0.0
    %226 = vmatprep.subr.mxu0 0.0
    %227 = vmatpush1.msra.mxu0 0.0
    %228 = vmatprep.subr.mxu0 0.0
    %229 = vmatpush1.msra.mxu0 0.0
    %230 = vmatprep.subr.mxu0 0.0
    %231 = vmatpush1.msra.mxu0 0.0
    %232 = vmatprep.subr.mxu0 0.0
    %233 = vmatpush1.msra.mxu0 0.0
    %234 = vmatprep.mubr.f32.mxu0 0.0
    %235 = vmatmul.mubr.f32.gmra.mrb[0].mxu0 %v168
    %v236 = vpop.f32.mrb[0].mxu0
    %v237 = vadd.f32 %v166, %v236
    %v238 = vpop.f32.mrb[0].mxu0
    %239 = vdwg.mxu0
    %v240 = vmax.f32 %v237, 0.0
    %s241 = scalar_lea.vmem [#allocation5], 64
    %v242 = vld [vmem:[%s241] sm:$0xff]
    %v243 = vld [vmem:[%s241 + $0x8] sm:$0xff]
    %v244 = vld [vmem:[%s241 + $0x10] sm:$0xff]
    %v245 = vld [vmem:[%s241 + $0x18] sm:$0xff]
    %v246 = vlaneseq
    %v247 = vshrl.u32 %v246, 7
    %v248 = vsub.s32 2, %v247
    %v249 = vrot.slane %v41, %v248
    %v251 = vsel %vm143, %v240, 0
    %253 = vmatprep.subr.mxu0 0.0
    %254 = vmatpush1.msra.mxu0 %v242
    %255 = vmatprep.subr.mxu0 0.0
    %256 = vmatpush1.msra.mxu0 %v243
    %257 = vmatprep.subr.mxu0 0.0
    %258 = vmatpush1.msra.mxu0 %v244
    %259 = vmatprep.subr.mxu0 0.0
    %260 = vmatpush1.msra.mxu0 %v245
    %261 = vmatprep.subr.mxu0 0.0
    %262 = vmatpush1.msra.mxu0 0.0
    %263 = vmatprep.subr.mxu0 0.0
    %264 = vmatpush1.msra.mxu0 0.0
    %265 = vmatprep.subr.mxu0 0.0
    %266 = vmatpush1.msra.mxu0 0.0
    %267 = vmatprep.subr.mxu0 0.0
    %268 = vmatpush1.msra.mxu0 0.0
    %269 = vmatprep.subr.mxu0 0.0
    %270 = vmatpush1.msra.mxu0 0.0
    %271 = vmatprep.subr.mxu0 0.0
    %272 = vmatpush1.msra.mxu0 0.0
    %273 = vmatprep.subr.mxu0 0.0
    %274 = vmatpush1.msra.mxu0 0.0
    %275 = vmatprep.subr.mxu0 0.0
    %276 = vmatpush1.msra.mxu0 0.0
    %277 = vmatprep.subr.mxu0 0.0
    %278 = vmatpush1.msra.mxu0 0.0
    %279 = vmatprep.subr.mxu0 0.0
    %280 = vmatpush1.msra.mxu0 0.0
    %281 = vmatprep.subr.mxu0 0.0
    %282 = vmatpush1.msra.mxu0 0.0
    %283 = vmatprep.subr.mxu0 0.0
    %284 = vmatpush1.msra.mxu0 0.0
    %285 = vmatprep.subr.mxu0 0.0
    %286 = vmatpush1.msra.mxu0 0.0
    %287 = vmatprep.subr.mxu0 0.0
    %288 = vmatpush1.msra.mxu0 0.0
    %289 = vmatprep.subr.mxu0 0.0
    %290 = vmatpush1.msra.mxu0 0.0
    %291 = vmatprep.subr.mxu0 0.0
    %292 = vmatpush1.msra.mxu0 0.0
    %293 = vmatprep.subr.mxu0 0.0
    %294 = vmatpush1.msra.mxu0 0.0
    %295 = vmatprep.subr.mxu0 0.0
    %296 = vmatpush1.msra.mxu0 0.0
    %297 = vmatprep.subr.mxu0 0.0
    %298 = vmatpush1.msra.mxu0 0.0
    %299 = vmatprep.subr.mxu0 0.0
    %300 = vmatpush1.msra.mxu0 0.0
    %301 = vmatprep.subr.mxu0 0.0
    %302 = vmatpush1.msra.mxu0 0.0
    %303 = vmatprep.subr.mxu0 0.0
    %304 = vmatpush1.msra.mxu0 0.0
    %305 = vmatprep.subr.mxu0 0.0
    %306 = vmatpush1.msra.mxu0 0.0
    %307 = vmatprep.subr.mxu0 0.0
    %308 = vmatpush1.msra.mxu0 0.0
    %309 = vmatprep.subr.mxu0 0.0
    %310 = vmatpush1.msra.mxu0 0.0
    %311 = vmatprep.subr.mxu0 0.0
    %312 = vmatpush1.msra.mxu0 0.0
    %313 = vmatprep.subr.mxu0 0.0
    %314 = vmatpush1.msra.mxu0 0.0
    %315 = vmatprep.subr.mxu0 0.0
    %316 = vmatpush1.msra.mxu0 0.0
    %317 = vmatprep.mubr.f32.mxu0 0.0
    %318 = vmatmul.mubr.f32.gmra.mrb[0].mxu0 %v251
    %v319 = vpop.f32.mrb[0].mxu0
    %v320 = vadd.f32 %v249, %v319
    %v321 = vpop.f32.mrb[0].mxu0
    %322 = vdwg.mxu0
    %v323 = vlaneseq
    %v324 = vand.u32 %v323, 127
    %vm325 = vcmp.eq.s32.totalorder %v324, 12
    %v326 = vtanh.pop %v320
    %v327 = vsel %vm325, %v326, %v320
    %328 = vst [vmem:[#allocation7] sm:$0xff] %v327
    // Predicated region
    $region22: #{tpu_custom_call.1} parent=1 // pred_check
      _
    $region23: #{tpu_custom_call.1} parent=1 // pred_check_branch
      %330 = sbr.rel (0) target = $region25
    $region24: #{tpu_custom_call.1} parent=1 // pred_region
      %s332 = ssub.s32 128, 128
      %333 = vsyncadd [#allocation4], %s332
      %s335 = sshll.u32 [#allocation7], 4
      %s336 = int_to_ptr.vmem [resolvable:$true] %s335
      %338 = dma.vmem_to_hbm [thread:$0]  %s336, 128, %s3, [#allocation4]
    $region25: #{tpu_custom_call.1} parent=1 // pred_fallthru
      _
    // Predicated region
    $region26: #{tpu_custom_call.1} parent=1 // pred_check
      _
    $region27: #{tpu_custom_call.1} parent=1 // pred_check_branch
      %340 = sbr.rel (0) target = $region29
    $region28: #{tpu_custom_call.1} parent=1 // pred_region
      %341 = dma.done [#allocation4], 128
    $region29: #{tpu_custom_call.1} parent=1 // pred_fallthru
      _
    %342 = vsyncpa [#allocation3], 1
    %343 = vsyncpa [#allocation6], 1
    %344 = vsyncpa [#allocation4], 1

</llo_original>
